<compile_context>
chip_gen: v7x
topology: tpu7x:2x2x1
jax: 0.10.0
libtpu: 0.0.40
codegen_flags: <defaults>
</compile_context>

<pallas_src>
import jax
import jax.numpy as jnp
from jax.experimental import pallas as pl
from jax.experimental.pallas import tpu as pltpu


def _policy_net_kernel(x_ref, w1_ref, b1_ref, w2_ref, b2_ref, o_ref):
    """One batch tile: Linear -> ReLU -> Linear -> softmax(dim=-1).

    x_ref  : (TB, S)      f32 states (cast to the MXU dtype in-kernel)
    w1_ref : (S, H)       first-layer weight, (in, out), bf16 or f32
    b1_ref : (1, H)       f32 bias
    w2_ref : (H, A_pad)   second-layer weight, zero-padded to lane-dense width
    b2_ref : (1, A_pad)   f32 bias; padded lanes hold -1e30 -> softmax prob 0
    o_ref  : (TB, A_pad)  f32 probabilities (lane-dense store)
    """
    mm_dtype = w1_ref.dtype                      # bf16 on the fast path
    x = x_ref[...].astype(mm_dtype)

    # Layer 1 on the MXU (f32 accumulation); bias + ReLU in f32 on the VPU.
    h = jnp.dot(x, w1_ref[...], preferred_element_type=jnp.float32)
    h = jnp.maximum(h + b1_ref[...], 0.0)

    # Layer 2 on the MXU; logits in f32.
    logits = jnp.dot(h.astype(mm_dtype), w2_ref[...],
                     preferred_element_type=jnp.float32)
    logits = logits + b2_ref[...]                # padded lanes ~ -1e30

    # Numerically stable softmax in f32; padded lanes exp() to exactly 0 so
    # they drop out of the sum and store 0 probability.
    m = jnp.max(logits, axis=-1, keepdims=True)
    e = jnp.exp(logits - m)
    denom = jnp.sum(e, axis=-1, keepdims=True)
    o_ref[...] = (e * pl.reciprocal(denom, approx=True)).astype(o_ref.dtype)


def policy_net_forward(state, w1, b1, w2, b2, *, block_b=512,
                       use_bf16_matmul=True):
    """Pallas forward pass.

    state : (B, state_dim)            float32
    w1    : (state_dim, hidden_dim)   float32  (already transposed vs. PyTorch)
    b1    : (hidden_dim,)             float32
    w2    : (hidden_dim, action_dim)  float32  (already transposed vs. PyTorch)
    b2    : (action_dim,)             float32
    block_b : batch rows per grid step (multiple of 8); 512 keeps the tile in
              the ~85%-of-roofline regime and is tiny vs. any VMEM budget
              (including v7x's 64 MiB), so no vmem_limit override is needed.
    returns (B, action_dim) action probabilities, rows sum to 1.
    """
    assert block_b % 8 == 0
    B, S = state.shape
    H = w1.shape[1]
    A = w2.shape[1]

    # ---- lane-dense action dimension (pad A -> multiple of 128) ------------
    A_pad = 128 * pl.cdiv(A, 128)
    mm_dtype = jnp.bfloat16 if use_bf16_matmul else jnp.float32
    w1_c = w1.astype(mm_dtype)
    w2_p = jnp.zeros((H, A_pad), mm_dtype).at[:, :A].set(w2.astype(mm_dtype))
    b1_2d = b1.reshape(1, H).astype(jnp.float32)
    b2_p = jnp.full((1, A_pad), -1e30, jnp.float32).at[:, :A].set(
        b2.reshape(1, A).astype(jnp.float32))

    # ---- batch tiling (pad B up to a whole number of sublane-aligned tiles) -
    tb = block_b if B >= block_b else 8 * pl.cdiv(B, 8)
    b_pad = tb * pl.cdiv(B, tb)
    if b_pad != B:
        state_p = jnp.zeros((b_pad, S), state.dtype).at[:B].set(state)
    else:
        state_p = state
    nb = b_pad // tb

    out = pl.pallas_call(
        _policy_net_kernel,
        out_shape=jax.ShapeDtypeStruct((b_pad, A_pad), jnp.float32),
        grid=(nb,),
        in_specs=[
            pl.BlockSpec((tb, S), lambda i: (i, 0)),       # streamed batch tile
            pl.BlockSpec((S, H), lambda i: (0, 0)),        # resident weights
            pl.BlockSpec((1, H), lambda i: (0, 0)),
            pl.BlockSpec((H, A_pad), lambda i: (0, 0)),
            pl.BlockSpec((1, A_pad), lambda i: (0, 0)),
        ],
        out_specs=pl.BlockSpec((tb, A_pad), lambda i: (i, 0)),
        compiler_params=pltpu.CompilerParams(
            dimension_semantics=("parallel",)),
    )(state_p, w1_c, b1_2d, w2_p, b2_p)

    # Slice off batch padding and the lane-dense action padding.
    return out[:B, :A]


def init_params(key, state_dim, hidden_dim, action_dim):
    """Deterministic parameter init (synthetic; matches nn.Linear shapes)."""
    k1, k2, k3, k4 = jax.random.split(key, 4)
    bound1 = 1.0 / jnp.sqrt(state_dim)
    bound2 = 1.0 / jnp.sqrt(hidden_dim)
    # Stored directly in (in, out) layout for the kernel.
    w1 = jax.random.uniform(k1, (state_dim, hidden_dim), jnp.float32, -bound1, bound1)
    b1 = jax.random.uniform(k2, (hidden_dim,), jnp.float32, -bound1, bound1)
    w2 = jax.random.uniform(k3, (hidden_dim, action_dim), jnp.float32, -bound2, bound2)
    b2 = jax.random.uniform(k4, (action_dim,), jnp.float32, -bound2, bound2)
    return w1, b1, w2, b2


def reference_forward(state, w1, b1, w2, b2):
    h = jnp.maximum(state @ w1 + b1, 0.0)
    logits = h @ w2 + b2
    return jax.nn.softmax(logits, axis=-1)


if __name__ == "__main__":
    # CartPole-like feature sizes; exercise both a tiny per-step batch and a
    # larger rollout batch (non-multiple of the tile, to exercise padding).
    STATE_DIM, HIDDEN_DIM, ACTION_DIM = 4, 32, 2

    key = jax.random.PRNGKey(0)
    k_state, k_params = jax.random.split(key)
    w1, b1, w2, b2 = init_params(k_params, STATE_DIM, HIDDEN_DIM, ACTION_DIM)

    for B in (8, 1000):
        ks = jax.random.fold_in(k_state, B)
        state = jax.random.normal(ks, (B, STATE_DIM), dtype=jnp.float32)
        ref = reference_forward(state, w1, b1, w2, b2)

        # Default path: bf16 MXU operands, f32 accumulation / softmax.
        probs = jax.block_until_ready(policy_net_forward(state, w1, b1, w2, b2))
        assert probs.shape == (B, ACTION_DIM)
        assert jnp.allclose(probs, ref, atol=2e-2, rtol=2e-2)
        assert jnp.allclose(jnp.sum(probs, axis=-1), 1.0, atol=1e-2)

        # f32 MXU path: only the approximate reciprocal differs from reference.
        probs_f32 = jax.block_until_ready(
            policy_net_forward(state, w1, b1, w2, b2, use_bf16_matmul=False))
        assert jnp.allclose(probs_f32, ref, atol=5e-3, rtol=5e-3)

    print("KERNEL_OK")
</pallas_src>

<mosaic_0001>
module attributes {stable_mosaic.version = 11 : i64} {
  func.func @_policy_net_kernel(%arg0: i32, %arg1: memref<8x4xf32, #tpu.memory_space<vmem>>, %arg2: memref<4x32xbf16, #tpu.memory_space<vmem>>, %arg3: memref<1x32xf32, #tpu.memory_space<vmem>>, %arg4: memref<32x128xbf16, #tpu.memory_space<vmem>>, %arg5: memref<1x128xf32, #tpu.memory_space<vmem>>, %arg6: memref<8x128xf32, #tpu.memory_space<vmem>>) attributes {dimension_semantics = [#tpu.dimension_semantics<parallel>], iteration_bounds = array<i64: 1>, scalar_prefetch = 0 : i64, scratch_operands = 0 : i64, tpu.core_type = #tpu.core_type<tc>, window_params = [{transform_indices = @transform_0, window_bounds = array<i64: 8, 4>}, {pipeline_mode = #tpu.pipeline_mode<synchronous>, transform_indices = @transform_1, window_bounds = array<i64: 4, 32>}, {pipeline_mode = #tpu.pipeline_mode<synchronous>, transform_indices = @transform_2, window_bounds = array<i64: 1, 32>}, {pipeline_mode = #tpu.pipeline_mode<synchronous>, transform_indices = @transform_3, window_bounds = array<i64: 32, 128>}, {pipeline_mode = #tpu.pipeline_mode<synchronous>, transform_indices = @transform_4, window_bounds = array<i64: 1, 128>}, {transform_indices = @transform_5, window_bounds = array<i64: 8, 128>}]} {
    %c0 = arith.constant 0 : index
    %c0_0 = arith.constant 0 : index
    %0 = vector.load %arg1[%c0, %c0_0] : memref<8x4xf32, #tpu.memory_space<vmem>>, vector<8x4xf32>
    %1 = arith.truncf %0 : vector<8x4xf32> to vector<8x4xbf16>
    %c0_1 = arith.constant 0 : index
    %c0_2 = arith.constant 0 : index
    %2 = vector.load %arg2[%c0_1, %c0_2] : memref<4x32xbf16, #tpu.memory_space<vmem>>, vector<4x32xbf16>
    %cst = arith.constant dense<0.000000e+00> : vector<8x32xf32>
    %3 = tpu.matmul %1, %2, %cst {dimension_numbers = #tpu.dot_dimension_numbers<[1], [0], [0], [1], [0, 0, 1, 1], [], []>} : vector<8x4xbf16>, vector<4x32xbf16>, vector<8x32xf32> -> vector<8x32xf32>
    %c0_3 = arith.constant 0 : index
    %c0_4 = arith.constant 0 : index
    %4 = vector.load %arg3[%c0_3, %c0_4] : memref<1x32xf32, #tpu.memory_space<vmem>>, vector<1x32xf32>
    %5 = vector.broadcast %4 : vector<1x32xf32> to vector<8x32xf32>
    %6 = arith.addf %3, %5 : vector<8x32xf32>
    %cst_5 = arith.constant 0.000000e+00 : f32
    %7 = vector.broadcast %cst_5 : f32 to vector<8x32xf32>
    %8 = arith.maximumf %6, %7 : vector<8x32xf32>
    %9 = arith.truncf %8 : vector<8x32xf32> to vector<8x32xbf16>
    %c0_6 = arith.constant 0 : index
    %c0_7 = arith.constant 0 : index
    %10 = vector.load %arg4[%c0_6, %c0_7] : memref<32x128xbf16, #tpu.memory_space<vmem>>, vector<32x128xbf16>
    %cst_8 = arith.constant dense<0.000000e+00> : vector<8x128xf32>
    %11 = tpu.matmul %9, %10, %cst_8 {dimension_numbers = #tpu.dot_dimension_numbers<[1], [0], [0], [1], [0, 0, 1, 1], [], []>} : vector<8x32xbf16>, vector<32x128xbf16>, vector<8x128xf32> -> vector<8x128xf32>
    %c0_9 = arith.constant 0 : index
    %c0_10 = arith.constant 0 : index
    %12 = vector.load %arg5[%c0_9, %c0_10] : memref<1x128xf32, #tpu.memory_space<vmem>>, vector<1x128xf32>
    %13 = vector.broadcast %12 : vector<1x128xf32> to vector<8x128xf32>
    %14 = arith.addf %11, %13 : vector<8x128xf32>
    %cst_11 = arith.constant dense<0xFF800000> : vector<8xf32>
    %15 = vector.multi_reduction <maximumf>, %14, %cst_11 [1] : vector<8x128xf32> to vector<8xf32>
    %16 = vector.shape_cast %15 : vector<8xf32> to vector<8x1xf32>
    %17 = vector.broadcast %16 : vector<8x1xf32> to vector<8x128xf32>
    %18 = arith.subf %14, %17 : vector<8x128xf32>
    %19 = math.exp %18 : vector<8x128xf32>
    %cst_12 = arith.constant dense<0.000000e+00> : vector<8xf32>
    %20 = vector.multi_reduction <add>, %19, %cst_12 [1] : vector<8x128xf32> to vector<8xf32>
    %21 = vector.shape_cast %20 : vector<8xf32> to vector<8x1xf32>
    %22 = tpu.reciprocal %21 {approx = true} : vector<8x1xf32> -> vector<8x1xf32>
    %23 = vector.broadcast %22 : vector<8x1xf32> to vector<8x128xf32>
    %24 = arith.mulf %19, %23 : vector<8x128xf32>
    %c0_13 = arith.constant 0 : index
    %c0_14 = arith.constant 0 : index
    %25 = vector.load %arg6[%c0_13, %c0_14] : memref<8x128xf32, #tpu.memory_space<vmem>>, vector<8x128xf32>
    tpu.vector_store %arg6[%c0_13, %c0_14], %24 {strides = array<i32>} : memref<8x128xf32, #tpu.memory_space<vmem>>, vector<8x128xf32>,
    return
  }
  func.func @transform_0(%arg0: i32) -> (i32, i32) {
    %c0_i32 = arith.constant 0 : i32
    %c0_i32_0 = arith.constant 0 : i32
    return %arg0, %c0_i32 : i32, i32
  }
  func.func @transform_1(%arg0: i32) -> (i32, i32) {
    %c0_i32 = arith.constant 0 : i32
    %c0_i32_0 = arith.constant 0 : i32
    %c0_i32_1 = arith.constant 0 : i32
    return %c0_i32, %c0_i32_0 : i32, i32
  }
  func.func @transform_2(%arg0: i32) -> (i32, i32) {
    %c0_i32 = arith.constant 0 : i32
    %c0_i32_0 = arith.constant 0 : i32
    %c0_i32_1 = arith.constant 0 : i32
    return %c0_i32, %c0_i32_0 : i32, i32
  }
  func.func @transform_3(%arg0: i32) -> (i32, i32) {
    %c0_i32 = arith.constant 0 : i32
    %c0_i32_0 = arith.constant 0 : i32
    %c0_i32_1 = arith.constant 0 : i32
    return %c0_i32, %c0_i32_0 : i32, i32
  }
  func.func @transform_4(%arg0: i32) -> (i32, i32) {
    %c0_i32 = arith.constant 0 : i32
    %c0_i32_0 = arith.constant 0 : i32
    %c0_i32_1 = arith.constant 0 : i32
    return %c0_i32, %c0_i32_0 : i32, i32
  }
  func.func @transform_5(%arg0: i32) -> (i32, i32) {
    %c0_i32 = arith.constant 0 : i32
    %c0_i32_0 = arith.constant 0 : i32
    return %arg0, %c0_i32 : i32, i32
  }
}

</mosaic_0001>

<llo_original>
// kernel: tpu_custom_call.1
$region0: #{tpu_custom_call.1}
  #allocation0 [shape = 'u32[]', space=smem, size = 0x4, offset = 0x4, fixed_abs, tag = 'smem constant byte address 0x4 - core index']
  #allocation1 [shape = 'u32[144,128]{1,0:T(1,128)}', space=vmem, size = 0x12000, scoped, tag = 'internal scratch']
  %s0 = inlined_call_operand.vmem [shape: f32[8,4], index: 0, kind: input, shape index: {}]
  %s1 = inlined_call_operand.vmem [shape: bf16[4,32], index: 1, kind: input, shape index: {}]
  %s2 = inlined_call_operand.vmem [shape: f32[1,32], index: 2, kind: input, shape index: {}]
  %s3 = inlined_call_operand.vmem [shape: bf16[32,128], index: 3, kind: input, shape index: {}]
  %s4 = inlined_call_operand.vmem [shape: f32[1,128], index: 4, kind: input, shape index: {}]
  %s5 = inlined_call_operand.hbm [shape: f32[8,128], index: 5, kind: output, shape index: {}]
  %s6 = sld [smem:[#allocation0]]
  $region30: #{tpu_custom_call.1} parent=0
    _
  %s8 = ssub.s32 1, %s6
  %s9 = scalar_select 0, %s8, %s6
  $region1: #{tpu_custom_call.1} parent=0
    #allocation2 [shape = 'u8[4096]{0}', space=vmem, size = 0x1000, scoped, tag = 'output window, operand 0, single buffered']
    #allocation3 [shape = 's32[1]{0}', space=sflag, size = 0x4, scoped, tag = 'scoped memory for tpu_custom_call.1']
    %10 = vsyncpa [#allocation3], 0
    // Predicated region
    $region2: #{tpu_custom_call.1} parent=1 // pred_check
      _
    $region3: #{tpu_custom_call.1} parent=1 // pred_check_branch
      %12 = sbr.rel (0) target = $region5
    $region4: #{tpu_custom_call.1} parent=1 // pred_region
      _
    $region5: #{tpu_custom_call.1} parent=1 // pred_fallthru
      _
    // Predicated region
    $region6: #{tpu_custom_call.1} parent=1 // pred_check
      _
    $region7: #{tpu_custom_call.1} parent=1 // pred_check_branch
      %14 = sbr.rel (0) target = $region9
    $region8: #{tpu_custom_call.1} parent=1 // pred_region
      _
    $region9: #{tpu_custom_call.1} parent=1 // pred_fallthru
      _
    // Predicated region
    $region10: #{tpu_custom_call.1} parent=1 // pred_check
      _
    $region11: #{tpu_custom_call.1} parent=1 // pred_check_branch
      %16 = sbr.rel (0) target = $region13
    $region12: #{tpu_custom_call.1} parent=1 // pred_region
      _
    $region13: #{tpu_custom_call.1} parent=1 // pred_fallthru
      _
    // Predicated region
    $region14: #{tpu_custom_call.1} parent=1 // pred_check
      _
    $region15: #{tpu_custom_call.1} parent=1 // pred_check_branch
      %18 = sbr.rel (0) target = $region17
    $region16: #{tpu_custom_call.1} parent=1 // pred_region
      _
    $region17: #{tpu_custom_call.1} parent=1 // pred_fallthru
      _
    // Predicated region
    $region18: #{tpu_custom_call.1} parent=1 // pred_check
      _
    $region19: #{tpu_custom_call.1} parent=1 // pred_check_branch
      %20 = sbr.rel (0) target = $region21
    $region20: #{tpu_custom_call.1} parent=1 // pred_region
      _
    $region21: #{tpu_custom_call.1} parent=1 // pred_fallthru
      _
    %v22 = vld [vmem:[%s0] sm:$0xff]
    %v23 = vpack.c.bf16 %v22, %v22
    %v24 = vld [vmem:[%s1] sm:$0x3]
    %v25 = vld [vmem:[%s2] sm:$0x1]
    %v27 = vlaneseq
    %v28 = vshrl.u32 %v27, 7
    %v29 = vsub.s32 0, %v28
    %v30 = vrot.slane %v25, %v29
    %vm32 = vcmask 31744
    %v34 = vsel %vm32, %v23, 0
    %vm36 = vcmask 1041408
    %v38 = vsel %vm36, %v24, 0
    %40 = vmatprep.subr.bf16.mxu0 0
    %41 = vmatpush1.bf16.msra.mxu0 %v38
    %42 = vmatprep.subr.bf16.mxu0 0
    %43 = vmatpush1.bf16.msra.mxu0 0
    %44 = vmatprep.subr.bf16.mxu0 0
    %45 = vmatpush1.bf16.msra.mxu0 0
    %46 = vmatprep.subr.bf16.mxu0 0
    %47 = vmatpush1.bf16.msra.mxu0 0
    %48 = vmatprep.subr.bf16.mxu0 0
    %49 = vmatpush1.bf16.msra.mxu0 0
    %50 = vmatprep.subr.bf16.mxu0 0
    %51 = vmatpush1.bf16.msra.mxu0 0
    %52 = vmatprep.subr.bf16.mxu0 0
    %53 = vmatpush1.bf16.msra.mxu0 0
    %54 = vmatprep.subr.bf16.mxu0 0
    %55 = vmatpush1.bf16.msra.mxu0 0
    %56 = vmatprep.subr.bf16.mxu0 0
    %57 = vmatpush1.bf16.msra.mxu0 0
    %58 = vmatprep.subr.bf16.mxu0 0
    %59 = vmatpush1.bf16.msra.mxu0 0
    %60 = vmatprep.subr.bf16.mxu0 0
    %61 = vmatpush1.bf16.msra.mxu0 0
    %62 = vmatprep.subr.bf16.mxu0 0
    %63 = vmatpush1.bf16.msra.mxu0 0
    %64 = vmatprep.subr.bf16.mxu0 0
    %65 = vmatpush1.bf16.msra.mxu0 0
    %66 = vmatprep.subr.bf16.mxu0 0
    %67 = vmatpush1.bf16.msra.mxu0 0
    %68 = vmatprep.subr.bf16.mxu0 0
    %69 = vmatpush1.bf16.msra.mxu0 0
    %70 = vmatprep.subr.bf16.mxu0 0
    %71 = vmatpush1.bf16.msra.mxu0 0
    %72 = vmatprep.mubr.bf16.mxu0 0
    %73 = vmatmul.mubr.bf16.gmra.mrb[0].mxu0 %v34
    %v74 = vpop.f32.mrb[0].mxu0
    %v75 = vadd.f32 %v30, %v74
    %v76 = vpop.f32.mrb[0].mxu0
    %v77 = vpop.f32.mrb[0].mxu0
    %v78 = vpop.f32.mrb[0].mxu0
    %79 = vdwg.mxu0
    %v80 = vmax.f32 %v75, 0.0
    %v81 = vpack.c.bf16 %v80, %v80
    %v82 = vld [vmem:[%s3] sm:$0xf]
    %v83 = vld [vmem:[%s3 + $0x4] sm:$0xf]
    %v84 = vld [vmem:[%s3 + $0x8] sm:$0xf]
    %v85 = vld [vmem:[%s3 + $0xc] sm:$0xf]
    %v86 = vld [vmem:[%s4] sm:$0x1]
    %v88 = vlaneseq
    %v89 = vshrl.u32 %v88, 7
    %v90 = vsub.s32 0, %v89
    %v91 = vrot.slane %v86, %v90
    %v97 = vunpack.c.l.b16 %v82
    %v98 = vunpack.c.l.b16 %v83
    %v99 = vunpack.c.l.b16 %v84
    %v100 = vunpack.c.l.b16 %v85
    %v101 = vpack.c.b16 %v98, %v97
    %v102 = vpack.c.b16 %v100, %v99
    %vm105 = vcmask 261120
    %v107 = vsel %vm105, %v81, 0
    %109 = vmatprep.subr.bf16.mxu0 0
    %110 = vmatpush1.bf16.msra.mxu0 %v101
    %111 = vmatprep.subr.bf16.mxu0 0
    %112 = vmatpush1.bf16.msra.mxu0 %v102
    %113 = vmatprep.subr.bf16.mxu0 0
    %114 = vmatpush1.bf16.msra.mxu0 0
    %115 = vmatprep.subr.bf16.mxu0 0
    %116 = vmatpush1.bf16.msra.mxu0 0
    %117 = vmatprep.subr.bf16.mxu0 0
    %118 = vmatpush1.bf16.msra.mxu0 0
    %119 = vmatprep.subr.bf16.mxu0 0
    %120 = vmatpush1.bf16.msra.mxu0 0
    %121 = vmatprep.subr.bf16.mxu0 0
    %122 = vmatpush1.bf16.msra.mxu0 0
    %123 = vmatprep.subr.bf16.mxu0 0
    %124 = vmatpush1.bf16.msra.mxu0 0
    %125 = vmatprep.subr.bf16.mxu0 0
    %126 = vmatpush1.bf16.msra.mxu0 0
    %127 = vmatprep.subr.bf16.mxu0 0
    %128 = vmatpush1.bf16.msra.mxu0 0
    %129 = vmatprep.subr.bf16.mxu0 0
    %130 = vmatpush1.bf16.msra.mxu0 0
    %131 = vmatprep.subr.bf16.mxu0 0
    %132 = vmatpush1.bf16.msra.mxu0 0
    %133 = vmatprep.subr.bf16.mxu0 0
    %134 = vmatpush1.bf16.msra.mxu0 0
    %135 = vmatprep.subr.bf16.mxu0 0
    %136 = vmatpush1.bf16.msra.mxu0 0
    %137 = vmatprep.subr.bf16.mxu0 0
    %138 = vmatpush1.bf16.msra.mxu0 0
    %139 = vmatprep.subr.bf16.mxu0 0
    %140 = vmatpush1.bf16.msra.mxu0 0
    %141 = vmatprep.mubr.bf16.mxu0 0
    %142 = vmatmul.mubr.bf16.gmra.mrb[0].mxu0 %v107
    %v143 = vpop.f32.mrb[0].mxu0
    %v144 = vadd.f32 %v91, %v143
    %v145 = vpop.f32.mrb[0].mxu0
    %v146 = vpop.f32.mrb[0].mxu0
    %v147 = vpop.f32.mrb[0].mxu0
    %148 = vdwg.mxu0
    %149 = vmax.xlane.f32.xlu0 %v144
    %v150 = vpop.xlane.xlu0 %149
    %v151 = vsub.f32 %v144, %v150
    %v152 = vmul.f32 %v151, 1.442695
    %v153 = vpow.pop %v152
    %154 = vadd.xlane.f32.xlu0 %v153
    %v155 = vpop.xlane.xlu0 %154
    %v156 = vrcp.pop %v155
    %v157 = vmul.f32 %v153, %v156
    %158 = vst [vmem:[#allocation2] sm:$0xff] %v157
    // Predicated region
    $region22: #{tpu_custom_call.1} parent=1 // pred_check
      _
    $region23: #{tpu_custom_call.1} parent=1 // pred_check_branch
      %160 = sbr.rel (0) target = $region25
    $region24: #{tpu_custom_call.1} parent=1 // pred_region
      %s162 = ssub.s32 128, 128
      %163 = vsyncadd [#allocation3], %s162
      %s165 = sshll.u32 [#allocation2], 4
      %s166 = int_to_ptr.vmem [resolvable:$true] %s165
      %168 = dma.vmem_to_hbm [thread:$0]  %s166, 128, %s5, [#allocation3]
    $region25: #{tpu_custom_call.1} parent=1 // pred_fallthru
      _
    // Predicated region
    $region26: #{tpu_custom_call.1} parent=1 // pred_check
      _
    $region27: #{tpu_custom_call.1} parent=1 // pred_check_branch
      %170 = sbr.rel (0) target = $region29
    $region28: #{tpu_custom_call.1} parent=1 // pred_region
      %171 = dma.done [#allocation3], 128
    $region29: #{tpu_custom_call.1} parent=1 // pred_fallthru
      _
    %172 = vsyncpa [#allocation3], 1

</llo_original>
